<compile_context>
chip_gen: v6e
topology: v6e:2x2x1
jax: 0.10.0
libtpu: 0.0.40
codegen_flags: <defaults>
</compile_context>

<pallas_src>
import functools
import math

import jax
import jax.numpy as jnp
from jax.experimental import pallas as pl
from jax.experimental.pallas import tpu as pltpu


_TARGET_TILE_BYTES = 4 * 1024 * 1024   # per input tile (review: 2-4 MiB sweet spot)
_ROW_BLOCK_CAP = 128                    # (rows,128) f32 partial <= 16 vregs


def _wmse_kernel(x_ref, t_ref, acc_ref, *, tile_n, tiles_per_split, n_blocks,
                 ragged_last, overflow_possible, last_block_valid, unroll):
    """Accumulate per-row, per-lane sums of squared differences.

    x_ref/t_ref: (row_block, tile_n) input tiles (any float dtype; cast to f32).
    acc_ref:     (row_block, 128) f32 output block, resident across the column
                 reduction axis (one accumulator per (split, row_tile)).
    """
    c = pl.program_id(0)   # column-split axis ("parallel"; one per TC on v7x)
    k = pl.program_id(2)   # column-tile reduction axis (innermost)

    @pl.when(k == 0)
    def _():
        acc_ref[...] = jnp.zeros_like(acc_ref)

    rows = acc_ref.shape[0]
    n_chunks = tile_n // 128
    blk = c * tiles_per_split + k          # unclamped global column-block index

    def accumulate(masked):
        # `masked` is a trace-time bool: the fast path carries zero mask cost.
        if masked:
            # Hoisted out of the chunk loop; only the ragged last block pays it.
            lane = jax.lax.broadcasted_iota(jnp.int32, (rows, 128), 1)

        def body(i, part):
            start = pl.multiple_of(i * 128, 128)
            xv = x_ref[:, pl.ds(start, 128)].astype(jnp.float32)
            tv = t_ref[:, pl.ds(start, 128)].astype(jnp.float32)
            d = xv - tv
            d2 = d * d
            if masked:
                # Keep the select (NOT a multiply-by-mask) so uninitialized
                # VMEM lanes of the ragged block can never propagate NaN/Inf.
                d2 = jnp.where(lane < (last_block_valid - i * 128), d2, 0.0)
            return part + d2

        part = jax.lax.fori_loop(0, n_chunks, body,
                                 jnp.zeros((rows, 128), jnp.float32),
                                 unroll=unroll)
        acc_ref[...] += part

    if not ragged_last and not overflow_possible:
        # Common case: every block is full — single unmasked path, no branches.
        accumulate(masked=False)
    else:
        in_range = blk < n_blocks
        if ragged_last:
            is_last = blk == (n_blocks - 1)

            @pl.when(in_range & jnp.logical_not(is_last))
            def _():
                accumulate(masked=False)

            @pl.when(is_last)
            def _():
                accumulate(masked=True)
        else:
            # Only overflow grid points need special handling: skip them.
            @pl.when(in_range)
            def _():
                accumulate(masked=False)


def _row_sq_diff_sums(x2d, t2d, *, num_splits=1,
                      target_tile_bytes=_TARGET_TILE_BYTES):
    """Per-row sums of (x - t)**2 for 2-D inputs, via a Pallas TPU kernel."""
    rows, ncols = x2d.shape

    # Row tiling (keeps VMEM + vreg pressure bounded for large B*C).
    if rows <= _ROW_BLOCK_CAP:
        row_block, row_tiles = rows, 1
    else:
        row_block = _ROW_BLOCK_CAP
        row_tiles = pl.cdiv(rows, row_block)
    rows_padded = row_block * row_tiles

    # Bytes-based column tile: ~target_tile_bytes per input tile, multiple of
    # 128 lanes, never wider than the 128-rounded row length.
    itemsize = max(x2d.dtype.itemsize, t2d.dtype.itemsize)
    target_lanes = max(512, target_tile_bytes // max(1, row_block * itemsize))
    tile_n = max(128, (target_lanes // 128) * 128)
    tile_n = min(tile_n, pl.cdiv(ncols, 128) * 128)

    n_blocks = pl.cdiv(ncols, tile_n)
    num_splits = max(1, min(num_splits, n_blocks))
    tiles_per_split = pl.cdiv(n_blocks, num_splits)
    ragged_last = (ncols % tile_n) != 0
    overflow_possible = (num_splits * tiles_per_split) != n_blocks
    last_block_valid = ncols - (n_blocks - 1) * tile_n   # valid cols of last block

    unroll = max(1, min(4, tile_n // 128))

    def in_map(c, r, k):
        blk = c * tiles_per_split + k
        # Clamp overflow steps to the block already resident in VMEM so the
        # pipeline issues no extra DMA; the kernel skips those steps anyway.
        return (r, jnp.minimum(blk, n_blocks - 1))

    kernel = functools.partial(
        _wmse_kernel, tile_n=tile_n, tiles_per_split=tiles_per_split,
        n_blocks=n_blocks, ragged_last=ragged_last,
        overflow_possible=overflow_possible,
        last_block_valid=last_block_valid, unroll=unroll)

    # 2 inputs x 2 pipeline buffers + resident accumulator block, plus headroom.
    vmem_needed = 4 * row_block * tile_n * itemsize + 2 * row_block * 128 * 4
    vmem_limit = int(min(56 * 1024 * 1024,
                         max(32 * 1024 * 1024, vmem_needed + 8 * 1024 * 1024)))

    out = pl.pallas_call(
        kernel,
        out_shape=jax.ShapeDtypeStruct((num_splits, rows_padded, 128),
                                       jnp.float32),
        grid_spec=pltpu.PrefetchScalarGridSpec(
            num_scalar_prefetch=0,
            grid=(num_splits, row_tiles, tiles_per_split),
            in_specs=[
                pl.BlockSpec((row_block, tile_n), in_map),   # x tile
                pl.BlockSpec((row_block, tile_n), in_map),   # t tile
            ],
            # Per-(split, row_tile) resident accumulator (output = scratch).
            out_specs=pl.BlockSpec((None, row_block, 128),
                                   lambda c, r, k: (c, r, 0)),
        ),
        compiler_params=pltpu.CompilerParams(
            dimension_semantics=("parallel", "parallel", "arbitrary"),
            vmem_limit_bytes=vmem_limit,
        ),
    )(x2d, t2d)

    # Combine split partials, drop padded garbage rows, lane-reduce — tiny, in JAX.
    return jnp.sum(out[:, :rows, :], axis=(0, 2))   # (rows,)


def _default_num_splits():
    """2 column splits only on chips with 2 TensorCores behind one device."""
    try:
        kind = jax.devices()[0].device_kind.lower()
    except Exception:
        return 1
    if "v7" in kind or "7x" in kind or "v4" in kind or "v5p" in kind:
        return 2
    return 1   # v5e / v6e: a second split is pure grid-step overhead


def weighted_mse(inputs, targets, weight=None, out_shape=None, *, num_splits=None):
    """Pallas implementation of WeightedMSE.forward."""
    if num_splits is None:
        num_splits = _default_num_splits()

    if weight is not None:
        w = weight.astype(jnp.float32)
        w = w / jnp.sum(w)                              # weight / weight.sum()
        batch = inputs.shape[0]
        spatial = int(math.prod(out_shape))
        channels = inputs.size // (batch * spatial)
        rows = batch * channels
        # Free, contiguous view (B, C, *out_shape) -> (B*C, spatial).
        # NOTE: for bf16 with tiny B*C the sublanes are half-packed; required
        # by the per-channel row mapping and hidden under HBM bandwidth.
        x2d = inputs.reshape(rows, spatial)
        t2d = targets.reshape(rows, spatial)
        row_sums = _row_sq_diff_sums(x2d, t2d, num_splits=num_splits)
        per_channel = row_sums.reshape(batch, channels).sum(axis=0) / (batch * spatial)
        return jnp.sum(w * per_channel)

    # Plain MSE over the whole tensor; fold flat tensor into rows to fill
    # sublanes while keeping rows of at least ~512 columns.
    total = inputs.size
    rows = 1
    for cand in (128, 64, 32, 16, 8, 4, 2):
        if total % cand == 0 and total // cand >= 512:
            rows = cand
            break
    x2d = inputs.reshape(rows, total // rows)
    t2d = targets.reshape(rows, total // rows)
    row_sums = _row_sq_diff_sums(x2d, t2d, num_splits=num_splits)
    return jnp.sum(row_sums) / total


def _reference(inputs, targets, weight=None, out_shape=None):
    """Pure-JAX reference mirroring the PyTorch forward."""
    if weight is not None:
        w = weight / jnp.sum(weight)
        b = inputs.shape[0]
        d2 = (inputs.reshape(b, -1, *out_shape)
              - targets.reshape(b, -1, *out_shape)) ** 2
        axes = (0,) + tuple(range(2, d2.ndim))
        per_ch = jnp.mean(d2, axis=axes)
        return jnp.sum(w * per_ch)
    return jnp.mean((inputs - targets) ** 2)


if __name__ == "__main__":
    key = jax.random.PRNGKey(0)
    keys = jax.random.split(key, 8)

    # Case 1: weighted path, flattened NCHW inputs (B, C*H*W), out_shape=(16, 16).
    B, C, H, W = 2, 4, 16, 16
    x = jax.random.normal(keys[0], (B, C * H * W), dtype=jnp.float32)
    t = jax.random.normal(keys[1], (B, C * H * W), dtype=jnp.float32)
    w = jax.random.uniform(keys[2], (C,), dtype=jnp.float32) + 0.1
    got = jax.block_until_ready(weighted_mse(x, t, weight=w, out_shape=(H, W)))
    ref = _reference(x, t, weight=w, out_shape=(H, W))
    assert jnp.allclose(got, ref, rtol=1e-5, atol=1e-6), (got, ref)

    # Case 2: unweighted plain MSE.
    got_u = jax.block_until_ready(weighted_mse(x, t))
    ref_u = _reference(x, t)
    assert jnp.allclose(got_u, ref_u, rtol=1e-5, atol=1e-6), (got_u, ref_u)

    # Case 3: odd spatial sizes exercising the ragged-column mask path.
    B2, C2, H2, W2 = 2, 3, 5, 7
    x2 = jax.random.normal(keys[3], (B2, C2, H2, W2), dtype=jnp.float32)
    t2 = jax.random.normal(keys[4], (B2, C2, H2, W2), dtype=jnp.float32)
    w2 = jax.random.uniform(keys[5], (C2,), dtype=jnp.float32) + 0.1
    got2 = jax.block_until_ready(weighted_mse(x2, t2, weight=w2, out_shape=(H2, W2)))
    ref2 = _reference(x2, t2, weight=w2, out_shape=(H2, W2))
    assert jnp.allclose(got2, ref2, rtol=1e-5, atol=1e-6), (got2, ref2)

    # Case 4: unweighted with a total size not divisible by any fold factor.
    x3 = jax.random.normal(keys[6], (3, 5, 7), dtype=jnp.float32)
    t3 = jax.random.normal(keys[7], (3, 5, 7), dtype=jnp.float32)
    got3 = jax.block_until_ready(weighted_mse(x3, t3))
    ref3 = _reference(x3, t3)
    assert jnp.allclose(got3, ref3, rtol=1e-5, atol=1e-6), (got3, ref3)

    # Case 5: bf16 inputs stream as bf16 (kernel casts to f32 per chunk).
    xb = x.astype(jnp.bfloat16)
    tb = t.astype(jnp.bfloat16)
    gotb = jax.block_until_ready(weighted_mse(xb, tb, weight=w, out_shape=(H, W)))
    refb = _reference(xb.astype(jnp.float32), tb.astype(jnp.float32),
                      weight=w, out_shape=(H, W))
    assert jnp.allclose(gotb, refb, rtol=1e-5, atol=1e-6), (gotb, refb)

    # Case 6: internal helper with forced small tiles — exercises row tiling
    # (ragged last row block), multi-block column split across 2 splits, the
    # ragged last column block, and the overflow-skip path.
    xr = jax.random.normal(keys[0], (160, 1200), dtype=jnp.float32)
    tr = jax.random.normal(keys[1], (160, 1200), dtype=jnp.float32)
    got_r = jax.block_until_ready(
        _row_sq_diff_sums(xr, tr, num_splits=2, target_tile_bytes=64 * 1024))
    ref_r = jnp.sum((xr - tr) ** 2, axis=1)
    assert jnp.allclose(got_r, ref_r, rtol=1e-4, atol=1e-3), (got_r, ref_r)

    print("KERNEL_OK")
</pallas_src>

<mosaic_0001>
module attributes {stable_mosaic.version = 11 : i64} {
  func.func @_wmse_kernel(%arg0: i32, %arg1: i32, %arg2: i32, %arg3: memref<8x256xf32, #tpu.memory_space<vmem>>, %arg4: memref<8x256xf32, #tpu.memory_space<vmem>>, %arg5: memref<1x8x128xf32, #tpu.memory_space<vmem>>) attributes {dimension_semantics = [#tpu.dimension_semantics<parallel>, #tpu.dimension_semantics<parallel>, #tpu.dimension_semantics<arbitrary>], iteration_bounds = array<i64: 1, 1, 1>, scalar_prefetch = 0 : i64, scratch_operands = 0 : i64, tpu.core_type = #tpu.core_type<tc>, window_params = [{transform_indices = @transform_0, window_bounds = array<i64: 8, 256>}, {transform_indices = @transform_1, window_bounds = array<i64: 8, 256>}, {transform_indices = @transform_2, window_bounds = array<i64: 1, 8, 128>}]} {
    %c0_i32 = arith.constant 0 : i32
    %0 = arith.cmpi eq, %arg2, %c0_i32 : i32
    %1 = arith.extui %0 : i1 to i32
    %c0_i32_0 = arith.constant 0 : i32
    %2 = arith.cmpi ne, %1, %c0_i32_0 : i32
    scf.if %2 {
      %cst_12 = arith.constant 0.000000e+00 : f32
      %28 = vector.broadcast %cst_12 : f32 to vector<8x128xf32>
      %c0_13 = arith.constant 0 : index
      %c0_14 = arith.constant 0 : index
      %c0_15 = arith.constant 0 : index
      %29 = vector.load %arg5[%c0_13, %c0_14, %c0_15] : memref<1x8x128xf32, #tpu.memory_space<vmem>>, vector<1x8x128xf32>
      %30 = vector.shape_cast %29 : vector<1x8x128xf32> to vector<8x128xf32>
      %31 = vector.shape_cast %28 : vector<8x128xf32> to vector<1x8x128xf32>
      tpu.vector_store %arg5[%c0_13, %c0_14, %c0_15], %31 {strides = array<i32>} : memref<1x8x128xf32, #tpu.memory_space<vmem>>, vector<1x8x128xf32>,
    } else {
    }
    %cst = arith.constant 0.000000e+00 : f32
    %3 = vector.broadcast %cst : f32 to vector<8x128xf32>
    %c0_i32_1 = arith.constant 0 : i32
    %c128_i32 = arith.constant 128 : i32
    %4 = arith.muli %c0_i32_1, %c128_i32 : i32
    %5 = tpu.assume_multiple %4, 128 : i32
    %c0 = arith.constant 0 : index
    %6 = arith.index_cast %5 : i32 to index
    %7 = vector.load %arg3[%c0, %6] : memref<8x256xf32, #tpu.memory_space<vmem>>, vector<8x128xf32>
    %c0_2 = arith.constant 0 : index
    %8 = arith.index_cast %5 : i32 to index
    %9 = vector.load %arg4[%c0_2, %8] : memref<8x256xf32, #tpu.memory_space<vmem>>, vector<8x128xf32>
    %10 = arith.subf %7, %9 : vector<8x128xf32>
    %11 = arith.mulf %10, %10 : vector<8x128xf32>
    %12 = arith.addf %3, %11 : vector<8x128xf32>
    %c1_i32 = arith.constant 1 : i32
    %c128_i32_3 = arith.constant 128 : i32
    %13 = arith.muli %c1_i32, %c128_i32_3 : i32
    %14 = tpu.assume_multiple %13, 128 : i32
    %c0_4 = arith.constant 0 : index
    %15 = arith.index_cast %14 : i32 to index
    %16 = vector.load %arg3[%c0_4, %15] : memref<8x256xf32, #tpu.memory_space<vmem>>, vector<8x128xf32>
    %c0_5 = arith.constant 0 : index
    %17 = arith.index_cast %14 : i32 to index
    %18 = vector.load %arg4[%c0_5, %17] : memref<8x256xf32, #tpu.memory_space<vmem>>, vector<8x128xf32>
    %19 = arith.subf %16, %18 : vector<8x128xf32>
    %20 = arith.mulf %19, %19 : vector<8x128xf32>
    %21 = arith.addf %12, %20 : vector<8x128xf32>
    %c2_i32 = arith.constant 2 : i32
    %c0_6 = arith.constant 0 : index
    %c0_7 = arith.constant 0 : index
    %c0_8 = arith.constant 0 : index
    %22 = vector.load %arg5[%c0_6, %c0_7, %c0_8] : memref<1x8x128xf32, #tpu.memory_space<vmem>>, vector<1x8x128xf32>
    %23 = vector.shape_cast %22 : vector<1x8x128xf32> to vector<8x128xf32>
    %24 = arith.addf %23, %21 : vector<8x128xf32>
    %c0_9 = arith.constant 0 : index
    %c0_10 = arith.constant 0 : index
    %c0_11 = arith.constant 0 : index
    %25 = vector.load %arg5[%c0_9, %c0_10, %c0_11] : memref<1x8x128xf32, #tpu.memory_space<vmem>>, vector<1x8x128xf32>
    %26 = vector.shape_cast %25 : vector<1x8x128xf32> to vector<8x128xf32>
    %27 = vector.shape_cast %24 : vector<8x128xf32> to vector<1x8x128xf32>
    tpu.vector_store %arg5[%c0_9, %c0_10, %c0_11], %27 {strides = array<i32>} : memref<1x8x128xf32, #tpu.memory_space<vmem>>, vector<1x8x128xf32>,
    return
  }
  func.func @transform_0(%arg0: i32, %arg1: i32, %arg2: i32) -> (i32, i32) {
    %c1_i32 = arith.constant 1 : i32
    %0 = arith.muli %arg0, %c1_i32 : i32
    %1 = arith.addi %0, %arg2 : i32
    %c0_i32 = arith.constant 0 : i32
    %2 = arith.minsi %1, %c0_i32 : i32
    %c0_i32_0 = arith.constant 0 : i32
    return %arg1, %2 : i32, i32
  }
  func.func @transform_1(%arg0: i32, %arg1: i32, %arg2: i32) -> (i32, i32) {
    %c1_i32 = arith.constant 1 : i32
    %0 = arith.muli %arg0, %c1_i32 : i32
    %1 = arith.addi %0, %arg2 : i32
    %c0_i32 = arith.constant 0 : i32
    %2 = arith.minsi %1, %c0_i32 : i32
    %c0_i32_0 = arith.constant 0 : i32
    return %arg1, %2 : i32, i32
  }
  func.func @transform_2(%arg0: i32, %arg1: i32, %arg2: i32) -> (i32, i32, i32) {
    %c0_i32 = arith.constant 0 : i32
    %c0_i32_0 = arith.constant 0 : i32
    return %arg0, %arg1, %c0_i32 : i32, i32, i32
  }
}

</mosaic_0001>

<llo_original>
// kernel: tpu_custom_call.1
$region0: #{tpu_custom_call.1}
  #allocation0 [shape = 'u32[]', space=smem, size = 0x4, offset = 0x4, fixed_abs, tag = 'smem constant byte address 0x4 - core index']
  #allocation1 [shape = 'u32[144,128]{1,0:T(1,128)}', space=vmem, size = 0x12000, scoped, tag = 'internal scratch']
  %s0 = inlined_call_operand.hbm [shape: f32[8,256], index: 0, kind: input, shape index: {}]
  %s1 = inlined_call_operand.hbm [shape: f32[8,256], index: 1, kind: input, shape index: {}]
  %s2 = inlined_call_operand.hbm [shape: f32[1,8,128], index: 2, kind: output, shape index: {}]
  %s3 = sld [smem:[#allocation0]]
  $region30: #{tpu_custom_call.1} parent=0
    _
  %s5 = ssub.s32 1, %s3
  %s6 = scalar_select 0, %s5, %s3
  $region1: #{tpu_custom_call.1} parent=0
    #allocation2 [shape = 'u8[8192]{0}', space=vmem, size = 0x2000, scoped, tag = 'input window, operand 0, single buffered']
    #allocation3 [shape = 's32[1]{0}', space=sflag, size = 0x4, scoped, tag = 'scoped memory for tpu_custom_call.1']
    #allocation4 [shape = 's32[1]{0}', space=sflag, size = 0x4, scoped, tag = 'scoped memory for tpu_custom_call.1']
    #allocation5 [shape = 'u8[8192]{0}', space=vmem, size = 0x2000, scoped, tag = 'input window, operand 1, single buffered']
    #allocation6 [shape = 's32[1]{0}', space=sflag, size = 0x4, scoped, tag = 'scoped memory for tpu_custom_call.1']
    #allocation7 [shape = 'u8[4096]{0}', space=vmem, size = 0x1000, scoped, tag = 'output window, operand 0, single buffered']
    %7 = vsyncpa [#allocation3], 0
    %8 = vsyncpa [#allocation6], 0
    %9 = vsyncpa [#allocation4], 0
    // Predicated region
    $region2: #{tpu_custom_call.1} parent=1 // pred_check
      _
    $region3: #{tpu_custom_call.1} parent=1 // pred_check_branch
      %11 = sbr.rel (0) target = $region5
    $region4: #{tpu_custom_call.1} parent=1 // pred_region
      %s12 = sadd.s32 0, 0
      %p13 = scmp.lt.s32.totalorder %s12, 0
      %s14 = scalar_select %p13, %s12, 0
      %s15 = smul.u32 2, %s14
      %s17 = ssub.s32 256, 256
      %18 = vsyncadd [#allocation3], %s17
      %s19 = smul.addr %s15, 128
      %s20 = scalar_lea.hbm %s0, %s19
      %s22 = sshll.u32 [#allocation2], 4
      %s23 = int_to_ptr.vmem [resolvable:$true] %s22
      %25 = dma.hbm_to_vmem [thread:$0]  %s20, 256, %s23, [#allocation3]
    $region5: #{tpu_custom_call.1} parent=1 // pred_fallthru
      _
    // Predicated region
    $region6: #{tpu_custom_call.1} parent=1 // pred_check
      _
    $region7: #{tpu_custom_call.1} parent=1 // pred_check_branch
      %27 = sbr.rel (0) target = $region9
    $region8: #{tpu_custom_call.1} parent=1 // pred_region
      %s28 = sadd.s32 0, 0
      %p29 = scmp.lt.s32.totalorder %s28, 0
      %s30 = scalar_select %p29, %s28, 0
      %s31 = smul.u32 2, %s30
      %s33 = ssub.s32 256, 256
      %34 = vsyncadd [#allocation6], %s33
      %s35 = smul.addr %s31, 128
      %s36 = scalar_lea.hbm %s1, %s35
      %s38 = sshll.u32 [#allocation5], 4
      %s39 = int_to_ptr.vmem [resolvable:$true] %s38
      %41 = dma.hbm_to_vmem [thread:$0]  %s36, 256, %s39, [#allocation6]
    $region9: #{tpu_custom_call.1} parent=1 // pred_fallthru
      _
    // Predicated region
    $region10: #{tpu_custom_call.1} parent=1 // pred_check
      _
    $region11: #{tpu_custom_call.1} parent=1 // pred_check_branch
      %43 = sbr.rel (0) target = $region13
    $region12: #{tpu_custom_call.1} parent=1 // pred_region
      %44 = dma.done [#allocation3], 256
    $region13: #{tpu_custom_call.1} parent=1 // pred_fallthru
      _
    // Predicated region
    $region14: #{tpu_custom_call.1} parent=1 // pred_check
      _
    $region15: #{tpu_custom_call.1} parent=1 // pred_check_branch
      %46 = sbr.rel (0) target = $region17
    $region16: #{tpu_custom_call.1} parent=1 // pred_region
      %47 = dma.done [#allocation6], 256
    $region17: #{tpu_custom_call.1} parent=1 // pred_fallthru
      _
    %s48 = sadd.s32 0, 0
    %p49 = scmp.lt.s32.totalorder %s48, 0
    %s50 = scalar_select %p49, %s48, 0
    %s51 = smul.u32 2, %s50
    %s52 = sadd.s32 0, 0
    %p53 = scmp.lt.s32.totalorder %s52, 0
    %s54 = scalar_select %p53, %s52, 0
    %s55 = smul.u32 2, %s54
    %p56 = scmp.eq.s32.totalorder 0, 0
    // Predicated region
    $region18: #{tpu_custom_call.1} parent=1 // pred_check
      %p57 = pneg %p56
    $region19: #{tpu_custom_call.1} parent=1 // pred_check_branch
      %59 = sbr.rel (%p57) target = $region21
    $region20: #{tpu_custom_call.1} parent=1 // pred_region
      %60 = vst [vmem:[#allocation7] sm:$0xff] 0.0
    $region21: #{tpu_custom_call.1} parent=1 // pred_fallthru
      _
    %v61 = vld [vmem:[#allocation2] sm:$0xff]
    %v62 = vld [vmem:[#allocation5] sm:$0xff]
    %v63 = vsub.f32 %v61, %v62
    %v64 = vmul.f32 %v63, %v63
    %v65 = vadd.f32 %v64, 0.0
    %s66 = scalar_lea.vmem [#allocation2], 8
    %v67 = vld [vmem:[%s66] sm:$0xff]
    %s68 = scalar_lea.vmem [#allocation5], 8
    %v69 = vld [vmem:[%s68] sm:$0xff]
    %v70 = vsub.f32 %v67, %v69
    %v71 = vmul.f32 %v70, %v70
    %v72 = vadd.f32 %v65, %v71
    %v73 = vld [vmem:[#allocation7] sm:$0xff]
    %v74 = vadd.f32 %v73, %v72
    %75 = vst [vmem:[#allocation7] sm:$0xff] %v74
    // Predicated region
    $region22: #{tpu_custom_call.1} parent=1 // pred_check
      _
    $region23: #{tpu_custom_call.1} parent=1 // pred_check_branch
      %77 = sbr.rel (0) target = $region25
    $region24: #{tpu_custom_call.1} parent=1 // pred_region
      %s79 = ssub.s32 128, 128
      %80 = vsyncadd [#allocation4], %s79
      %s82 = sshll.u32 [#allocation7], 4
      %s83 = int_to_ptr.vmem [resolvable:$true] %s82
      %85 = dma.vmem_to_hbm [thread:$0]  %s83, 128, %s2, [#allocation4]
    $region25: #{tpu_custom_call.1} parent=1 // pred_fallthru
      _
    // Predicated region
    $region26: #{tpu_custom_call.1} parent=1 // pred_check
      _
    $region27: #{tpu_custom_call.1} parent=1 // pred_check_branch
      %87 = sbr.rel (0) target = $region29
    $region28: #{tpu_custom_call.1} parent=1 // pred_region
      %88 = dma.done [#allocation4], 128
    $region29: #{tpu_custom_call.1} parent=1 // pred_fallthru
      _
    %89 = vsyncpa [#allocation3], 1
    %90 = vsyncpa [#allocation6], 1
    %91 = vsyncpa [#allocation4], 1

</llo_original>
